<compile_context>
chip_gen: v5e
topology: v5e:2x2
jax: 0.10.0
libtpu: 0.0.40
codegen_flags: <defaults>
</compile_context>

<pallas_src>
import functools
import math

import jax
import jax.numpy as jnp
from jax import lax
from jax.experimental import pallas as pl
from jax.experimental.pallas import tpu as pltpu


def _round_up(x, m):
    return (x + m - 1) // m * m


# ----------------------------------------------------------------------------
# Fused kernel: per-sample stride-1 convolution + BN shift + ReLU.
#
#   x_ref     : (Cin, Lx)           bf16  zero-padded sample, spatial flattened
#   w_ref     : (KH*KW, Coutp, Cin) bf16  per-tap weights, BN scale pre-folded
#   shift_ref : (Coutp, 1)          f32   per-channel BN shift (+ conv bias)
#   o_ref     : (Coutp, L)          f32   L = Ho1 * Wp ("padded width" columns)
#
# For tap (dh, dw), the contribution to output column j = ho*Wp + wo is
#   W[dh,dw] @ x[:, j + dh*dil*Wp + dw*dil]
# so every tap is the SAME matmul against a contiguous, statically-offset
# window of the flattened activation block — no reshapes, no strided loads,
# no HBM re-reads.  Columns wo >= Wo1 accumulate junk (row wrap-around) and
# are sliced away in the wrapper.
# ----------------------------------------------------------------------------
def _conv_bn_relu_kernel(x_ref, w_ref, shift_ref, o_ref, *,
                         tap_offsets, n_cols, apply_relu):
    acc = None
    for t, off in enumerate(tap_offsets):
        rhs = x_ref[:, pl.ds(off, n_cols)]                        # (Cin, L) bf16
        part = jnp.dot(w_ref[t], rhs, preferred_element_type=jnp.float32)
        acc = part if acc is None else acc + part                 # (Coutp, L) f32
    y = acc + shift_ref[...]                                      # BN shift (+bias)
    if apply_relu:
        y = jnp.maximum(y, 0.0)
    o_ref[...] = y


# ----------------------------------------------------------------------------
# BasicConv forward (wrapper: layout/padding glue + one fused pallas_call)
# ----------------------------------------------------------------------------
def basic_conv_forward(x, params, *, stride=1, padding=0, dilation=1,
                       groups=1, relu=True, bn=True, eps=1e-5):
    """x: (B, Cin, H, W) NCHW -> (B, Cout, Ho, Wo) float32."""
    # TODO(synk): grouped conv (groups > 1) needs block-diagonal weights; the
    #             BasicConv default (groups=1) is what is implemented.
    assert groups == 1
    assert stride >= 1 and dilation >= 1

    B, Cin, H, W = x.shape
    w = params["conv_w"]                                    # (Cout, Cin, KH, KW)
    Cout, _, KH, KW = w.shape

    Hp, Wp = H + 2 * padding, W + 2 * padding
    Ho1 = Hp - dilation * (KH - 1)                          # stride-1 output size
    Wo1 = Wp - dilation * (KW - 1)
    assert Ho1 >= 1 and Wo1 >= 1

    # ---- fold BatchNorm (eval-mode running stats) + bias into scale/shift ----
    if bn:
        inv_std = lax.rsqrt(params["bn_var"].astype(jnp.float32) + eps)
        scale = params["bn_gamma"].astype(jnp.float32) * inv_std
        shift = (params["bn_beta"].astype(jnp.float32)
                 - params["bn_mean"].astype(jnp.float32) * scale)
    else:
        scale = jnp.ones((Cout,), jnp.float32)
        shift = jnp.zeros((Cout,), jnp.float32)
    if params.get("conv_b", None) is not None:
        shift = shift + scale * params["conv_b"].astype(jnp.float32)

    # ---- weights: fold BN scale (f32), reorder to per-tap (Coutp, Cin), bf16 ----
    Coutp = _round_up(Cout, 8)                              # sublane-friendly rows
    wt = jnp.transpose(w.astype(jnp.float32), (2, 3, 0, 1))          # (KH,KW,Cout,Cin)
    wt = wt * scale[None, None, :, None]
    wt = wt.reshape(KH * KW, Cout, Cin)
    wt = jnp.pad(wt, ((0, 0), (0, Coutp - Cout), (0, 0))).astype(jnp.bfloat16)
    shift_p = jnp.pad(shift, (0, Coutp - Cout)).reshape(Coutp, 1)

    # ---- activations: NCHW end-to-end, spatially zero-padded, bf16 ----
    L = Ho1 * Wp                                            # output cols (padded width)
    Lx = _round_up(Hp * Wp + (KW - 1) * dilation, 128)      # lane-dense input width
    xb = x.astype(jnp.bfloat16)
    xp = jnp.pad(xb, ((0, 0), (0, 0), (padding, padding), (padding, padding)))
    x2 = jnp.pad(xp.reshape(B, Cin, Hp * Wp), ((0, 0), (0, 0), (0, Lx - Hp * Wp)))

    tap_offsets = tuple(dh * dilation * Wp + dw * dilation
                        for dh in range(KH) for dw in range(KW))

    # ---- VMEM budget from actual block sizes, capped below v7x's 64 MiB ----
    in_bytes = Cin * Lx * 2
    w_bytes = KH * KW * Coutp * Cin * 2
    shift_bytes = Coutp * 128 * 4
    out_bytes = Coutp * L * 4
    needed = (2 * in_bytes + 2 * w_bytes + 2 * shift_bytes + 2 * out_bytes
              + out_bytes + (2 << 20))                      # + f32 accumulator + slack
    vmem_limit = int(min(max(2 * needed, 32 << 20), 48 << 20))

    kernel = functools.partial(_conv_bn_relu_kernel, tap_offsets=tap_offsets,
                               n_cols=L, apply_relu=relu)
    out = pl.pallas_call(
        kernel,
        out_shape=jax.ShapeDtypeStruct((B, Coutp, L), jnp.float32),
        grid=(B,),
        in_specs=[
            pl.BlockSpec((None, Cin, Lx), lambda b: (b, 0, 0)),
            # constant block index -> fetched once; KB-scale so default
            # double-buffering reservation is negligible here.
            pl.BlockSpec((KH * KW, Coutp, Cin), lambda b: (0, 0, 0)),
            pl.BlockSpec((Coutp, 1), lambda b: (0, 0)),
        ],
        out_specs=pl.BlockSpec((None, Coutp, L), lambda b: (b, 0, 0)),
        compiler_params=pltpu.CompilerParams(
            dimension_semantics=("parallel",),
            vmem_limit_bytes=vmem_limit),
    )(x2, wt, shift_p)

    out = out[:, :Cout, :].reshape(B, Cout, Ho1, Wp)[:, :, :, :Wo1]
    if stride > 1:
        # TODO(synk): native strided path; for now compute stride-1 and subsample.
        out = out[:, :, ::stride, ::stride]
    return out


# ----------------------------------------------------------------------------
# Main
# ----------------------------------------------------------------------------
if __name__ == "__main__":
    B, Cin, H, W = 2, 4, 16, 16
    Cout, ksz, stride, padding = 32, 3, 1, 1

    key = jax.random.PRNGKey(0)
    kx, kw, kg, kb, km, kv = jax.random.split(key, 6)

    x = jax.random.normal(kx, (B, Cin, H, W), jnp.float32)

    fan_in = Cin * ksz * ksz
    bound = 1.0 / math.sqrt(fan_in)
    params = dict(
        conv_w=jax.random.uniform(kw, (Cout, Cin, ksz, ksz), jnp.float32,
                                  -bound, bound),
        conv_b=None,                                  # bias=False in BasicConv
        bn_gamma=jax.random.uniform(kg, (Cout,), jnp.float32, 0.5, 1.5),
        bn_beta=jax.random.uniform(kb, (Cout,), jnp.float32, -0.5, 0.5),
        bn_mean=jax.random.uniform(km, (Cout,), jnp.float32, -0.1, 0.1),
        bn_var=jax.random.uniform(kv, (Cout,), jnp.float32, 0.5, 1.5),
    )

    fwd = jax.jit(functools.partial(
        basic_conv_forward, params=params,
        stride=stride, padding=padding, dilation=1, groups=1,
        relu=True, bn=True))
    out = fwd(x)
    jax.block_until_ready(out)

    # --- sanity check against a pure-jnp f32 reference of the same math ---
    def reference(xin):
        xpad = jnp.pad(xin, ((0, 0), (0, 0), (padding, padding), (padding, padding)))
        acc = jnp.zeros((B, Cout, H, W), jnp.float32)
        for dh in range(ksz):
            for dw in range(ksz):
                acc = acc + jnp.einsum("oc,bchw->bohw",
                                       params["conv_w"][:, :, dh, dw],
                                       xpad[:, :, dh:dh + H, dw:dw + W])
        inv = lax.rsqrt(params["bn_var"] + 1e-5)
        g = (params["bn_gamma"] * inv)[None, :, None, None]
        y = (acc - params["bn_mean"][None, :, None, None]) * g \
            + params["bn_beta"][None, :, None, None]
        return jnp.maximum(y, 0.0)

    ref = reference(x)
    max_err = float(jnp.max(jnp.abs(out - ref)))

    assert out.shape == (B, Cout, H, W), out.shape
    assert out.dtype == jnp.float32
    assert bool(jnp.all(jnp.isfinite(out)))
    assert bool(jnp.all(out >= 0.0))          # ReLU epilogue
    assert max_err < 5e-2, max_err            # bf16 operands, f32 accumulate
    print("KERNEL_OK")
</pallas_src>

<mosaic_0001>
module attributes {stable_mosaic.version = 11 : i64} {
  func.func @_conv_bn_relu_kernel(%arg0: i32, %arg1: memref<1x4x384xbf16, #tpu.memory_space<vmem>>, %arg2: memref<9x32x4xbf16, #tpu.memory_space<vmem>>, %arg3: memref<32x1xf32, #tpu.memory_space<vmem>>, %arg4: memref<1x32x288xf32, #tpu.memory_space<vmem>>) attributes {dimension_semantics = [#tpu.dimension_semantics<parallel>], iteration_bounds = array<i64: 2>, scalar_prefetch = 0 : i64, scratch_operands = 0 : i64, tpu.core_type = #tpu.core_type<tc>, window_params = [{transform_indices = @transform_0, window_bounds = array<i64: 1, 4, 384>}, {pipeline_mode = #tpu.pipeline_mode<synchronous>, transform_indices = @transform_1, window_bounds = array<i64: 9, 32, 4>}, {pipeline_mode = #tpu.pipeline_mode<synchronous>, transform_indices = @transform_2, window_bounds = array<i64: 32, 1>}, {transform_indices = @transform_3, window_bounds = array<i64: 1, 32, 288>}]} {
    %c0 = arith.constant 0 : index
    %c0_0 = arith.constant 0 : index
    %c0_1 = arith.constant 0 : index
    %0 = vector.load %arg1[%c0, %c0_0, %c0_1] : memref<1x4x384xbf16, #tpu.memory_space<vmem>>, vector<1x4x288xbf16>
    %1 = vector.shape_cast %0 : vector<1x4x288xbf16> to vector<4x288xbf16>
    %c0_2 = arith.constant 0 : index
    %c0_3 = arith.constant 0 : index
    %c0_4 = arith.constant 0 : index
    %2 = vector.load %arg2[%c0_2, %c0_3, %c0_4] : memref<9x32x4xbf16, #tpu.memory_space<vmem>>, vector<1x32x4xbf16>
    %3 = vector.shape_cast %2 : vector<1x32x4xbf16> to vector<32x4xbf16>
    %cst = arith.constant dense<0.000000e+00> : vector<32x288xf32>
    %4 = tpu.matmul %3, %1, %cst {dimension_numbers = #tpu.dot_dimension_numbers<[1], [0], [0], [1], [0, 0, 1, 1], [], []>} : vector<32x4xbf16>, vector<4x288xbf16>, vector<32x288xf32> -> vector<32x288xf32>
    %c0_5 = arith.constant 0 : index
    %c0_6 = arith.constant 0 : index
    %c1 = arith.constant 1 : index
    %5 = vector.load %arg1[%c0_5, %c0_6, %c1] : memref<1x4x384xbf16, #tpu.memory_space<vmem>>, vector<1x4x288xbf16>
    %6 = vector.shape_cast %5 : vector<1x4x288xbf16> to vector<4x288xbf16>
    %c1_7 = arith.constant 1 : index
    %c0_8 = arith.constant 0 : index
    %c0_9 = arith.constant 0 : index
    %7 = vector.load %arg2[%c1_7, %c0_8, %c0_9] : memref<9x32x4xbf16, #tpu.memory_space<vmem>>, vector<1x32x4xbf16>
    %8 = vector.shape_cast %7 : vector<1x32x4xbf16> to vector<32x4xbf16>
    %cst_10 = arith.constant dense<0.000000e+00> : vector<32x288xf32>
    %9 = tpu.matmul %8, %6, %cst_10 {dimension_numbers = #tpu.dot_dimension_numbers<[1], [0], [0], [1], [0, 0, 1, 1], [], []>} : vector<32x4xbf16>, vector<4x288xbf16>, vector<32x288xf32> -> vector<32x288xf32>
    %10 = arith.addf %4, %9 : vector<32x288xf32>
    %c0_11 = arith.constant 0 : index
    %c0_12 = arith.constant 0 : index
    %c2 = arith.constant 2 : index
    %11 = vector.load %arg1[%c0_11, %c0_12, %c2] : memref<1x4x384xbf16, #tpu.memory_space<vmem>>, vector<1x4x288xbf16>
    %12 = vector.shape_cast %11 : vector<1x4x288xbf16> to vector<4x288xbf16>
    %c2_13 = arith.constant 2 : index
    %c0_14 = arith.constant 0 : index
    %c0_15 = arith.constant 0 : index
    %13 = vector.load %arg2[%c2_13, %c0_14, %c0_15] : memref<9x32x4xbf16, #tpu.memory_space<vmem>>, vector<1x32x4xbf16>
    %14 = vector.shape_cast %13 : vector<1x32x4xbf16> to vector<32x4xbf16>
    %cst_16 = arith.constant dense<0.000000e+00> : vector<32x288xf32>
    %15 = tpu.matmul %14, %12, %cst_16 {dimension_numbers = #tpu.dot_dimension_numbers<[1], [0], [0], [1], [0, 0, 1, 1], [], []>} : vector<32x4xbf16>, vector<4x288xbf16>, vector<32x288xf32> -> vector<32x288xf32>
    %16 = arith.addf %10, %15 : vector<32x288xf32>
    %c0_17 = arith.constant 0 : index
    %c0_18 = arith.constant 0 : index
    %c18 = arith.constant 18 : index
    %17 = vector.load %arg1[%c0_17, %c0_18, %c18] : memref<1x4x384xbf16, #tpu.memory_space<vmem>>, vector<1x4x288xbf16>
    %18 = vector.shape_cast %17 : vector<1x4x288xbf16> to vector<4x288xbf16>
    %c3 = arith.constant 3 : index
    %c0_19 = arith.constant 0 : index
    %c0_20 = arith.constant 0 : index
    %19 = vector.load %arg2[%c3, %c0_19, %c0_20] : memref<9x32x4xbf16, #tpu.memory_space<vmem>>, vector<1x32x4xbf16>
    %20 = vector.shape_cast %19 : vector<1x32x4xbf16> to vector<32x4xbf16>
    %cst_21 = arith.constant dense<0.000000e+00> : vector<32x288xf32>
    %21 = tpu.matmul %20, %18, %cst_21 {dimension_numbers = #tpu.dot_dimension_numbers<[1], [0], [0], [1], [0, 0, 1, 1], [], []>} : vector<32x4xbf16>, vector<4x288xbf16>, vector<32x288xf32> -> vector<32x288xf32>
    %22 = arith.addf %16, %21 : vector<32x288xf32>
    %c0_22 = arith.constant 0 : index
    %c0_23 = arith.constant 0 : index
    %c19 = arith.constant 19 : index
    %23 = vector.load %arg1[%c0_22, %c0_23, %c19] : memref<1x4x384xbf16, #tpu.memory_space<vmem>>, vector<1x4x288xbf16>
    %24 = vector.shape_cast %23 : vector<1x4x288xbf16> to vector<4x288xbf16>
    %c4 = arith.constant 4 : index
    %c0_24 = arith.constant 0 : index
    %c0_25 = arith.constant 0 : index
    %25 = vector.load %arg2[%c4, %c0_24, %c0_25] : memref<9x32x4xbf16, #tpu.memory_space<vmem>>, vector<1x32x4xbf16>
    %26 = vector.shape_cast %25 : vector<1x32x4xbf16> to vector<32x4xbf16>
    %cst_26 = arith.constant dense<0.000000e+00> : vector<32x288xf32>
    %27 = tpu.matmul %26, %24, %cst_26 {dimension_numbers = #tpu.dot_dimension_numbers<[1], [0], [0], [1], [0, 0, 1, 1], [], []>} : vector<32x4xbf16>, vector<4x288xbf16>, vector<32x288xf32> -> vector<32x288xf32>
    %28 = arith.addf %22, %27 : vector<32x288xf32>
    %c0_27 = arith.constant 0 : index
    %c0_28 = arith.constant 0 : index
    %c20 = arith.constant 20 : index
    %29 = vector.load %arg1[%c0_27, %c0_28, %c20] : memref<1x4x384xbf16, #tpu.memory_space<vmem>>, vector<1x4x288xbf16>
    %30 = vector.shape_cast %29 : vector<1x4x288xbf16> to vector<4x288xbf16>
    %c5 = arith.constant 5 : index
    %c0_29 = arith.constant 0 : index
    %c0_30 = arith.constant 0 : index
    %31 = vector.load %arg2[%c5, %c0_29, %c0_30] : memref<9x32x4xbf16, #tpu.memory_space<vmem>>, vector<1x32x4xbf16>
    %32 = vector.shape_cast %31 : vector<1x32x4xbf16> to vector<32x4xbf16>
    %cst_31 = arith.constant dense<0.000000e+00> : vector<32x288xf32>
    %33 = tpu.matmul %32, %30, %cst_31 {dimension_numbers = #tpu.dot_dimension_numbers<[1], [0], [0], [1], [0, 0, 1, 1], [], []>} : vector<32x4xbf16>, vector<4x288xbf16>, vector<32x288xf32> -> vector<32x288xf32>
    %34 = arith.addf %28, %33 : vector<32x288xf32>
    %c0_32 = arith.constant 0 : index
    %c0_33 = arith.constant 0 : index
    %c36 = arith.constant 36 : index
    %35 = vector.load %arg1[%c0_32, %c0_33, %c36] : memref<1x4x384xbf16, #tpu.memory_space<vmem>>, vector<1x4x288xbf16>
    %36 = vector.shape_cast %35 : vector<1x4x288xbf16> to vector<4x288xbf16>
    %c6 = arith.constant 6 : index
    %c0_34 = arith.constant 0 : index
    %c0_35 = arith.constant 0 : index
    %37 = vector.load %arg2[%c6, %c0_34, %c0_35] : memref<9x32x4xbf16, #tpu.memory_space<vmem>>, vector<1x32x4xbf16>
    %38 = vector.shape_cast %37 : vector<1x32x4xbf16> to vector<32x4xbf16>
    %cst_36 = arith.constant dense<0.000000e+00> : vector<32x288xf32>
    %39 = tpu.matmul %38, %36, %cst_36 {dimension_numbers = #tpu.dot_dimension_numbers<[1], [0], [0], [1], [0, 0, 1, 1], [], []>} : vector<32x4xbf16>, vector<4x288xbf16>, vector<32x288xf32> -> vector<32x288xf32>
    %40 = arith.addf %34, %39 : vector<32x288xf32>
    %c0_37 = arith.constant 0 : index
    %c0_38 = arith.constant 0 : index
    %c37 = arith.constant 37 : index
    %41 = vector.load %arg1[%c0_37, %c0_38, %c37] : memref<1x4x384xbf16, #tpu.memory_space<vmem>>, vector<1x4x288xbf16>
    %42 = vector.shape_cast %41 : vector<1x4x288xbf16> to vector<4x288xbf16>
    %c7 = arith.constant 7 : index
    %c0_39 = arith.constant 0 : index
    %c0_40 = arith.constant 0 : index
    %43 = vector.load %arg2[%c7, %c0_39, %c0_40] : memref<9x32x4xbf16, #tpu.memory_space<vmem>>, vector<1x32x4xbf16>
    %44 = vector.shape_cast %43 : vector<1x32x4xbf16> to vector<32x4xbf16>
    %cst_41 = arith.constant dense<0.000000e+00> : vector<32x288xf32>
    %45 = tpu.matmul %44, %42, %cst_41 {dimension_numbers = #tpu.dot_dimension_numbers<[1], [0], [0], [1], [0, 0, 1, 1], [], []>} : vector<32x4xbf16>, vector<4x288xbf16>, vector<32x288xf32> -> vector<32x288xf32>
    %46 = arith.addf %40, %45 : vector<32x288xf32>
    %c0_42 = arith.constant 0 : index
    %c0_43 = arith.constant 0 : index
    %c38 = arith.constant 38 : index
    %47 = vector.load %arg1[%c0_42, %c0_43, %c38] : memref<1x4x384xbf16, #tpu.memory_space<vmem>>, vector<1x4x288xbf16>
    %48 = vector.shape_cast %47 : vector<1x4x288xbf16> to vector<4x288xbf16>
    %c8 = arith.constant 8 : index
    %c0_44 = arith.constant 0 : index
    %c0_45 = arith.constant 0 : index
    %49 = vector.load %arg2[%c8, %c0_44, %c0_45] : memref<9x32x4xbf16, #tpu.memory_space<vmem>>, vector<1x32x4xbf16>
    %50 = vector.shape_cast %49 : vector<1x32x4xbf16> to vector<32x4xbf16>
    %cst_46 = arith.constant dense<0.000000e+00> : vector<32x288xf32>
    %51 = tpu.matmul %50, %48, %cst_46 {dimension_numbers = #tpu.dot_dimension_numbers<[1], [0], [0], [1], [0, 0, 1, 1], [], []>} : vector<32x4xbf16>, vector<4x288xbf16>, vector<32x288xf32> -> vector<32x288xf32>
    %52 = arith.addf %46, %51 : vector<32x288xf32>
    %c0_47 = arith.constant 0 : index
    %c0_48 = arith.constant 0 : index
    %53 = vector.load %arg3[%c0_47, %c0_48] : memref<32x1xf32, #tpu.memory_space<vmem>>, vector<32x1xf32>
    %54 = vector.broadcast %53 : vector<32x1xf32> to vector<32x288xf32>
    %55 = arith.addf %52, %54 : vector<32x288xf32>
    %cst_49 = arith.constant 0.000000e+00 : f32
    %56 = vector.broadcast %cst_49 : f32 to vector<32x288xf32>
    %57 = arith.maximumf %55, %56 : vector<32x288xf32>
    %c0_50 = arith.constant 0 : index
    %c0_51 = arith.constant 0 : index
    %c0_52 = arith.constant 0 : index
    %58 = vector.load %arg4[%c0_50, %c0_51, %c0_52] : memref<1x32x288xf32, #tpu.memory_space<vmem>>, vector<1x32x288xf32>
    %59 = vector.shape_cast %58 : vector<1x32x288xf32> to vector<32x288xf32>
    %60 = vector.shape_cast %57 : vector<32x288xf32> to vector<1x32x288xf32>
    tpu.vector_store %arg4[%c0_50, %c0_51, %c0_52], %60 {strides = array<i32>} : memref<1x32x288xf32, #tpu.memory_space<vmem>>, vector<1x32x288xf32>,
    return
  }
  func.func @transform_0(%arg0: i32) -> (i32, i32, i32) {
    %c0_i32 = arith.constant 0 : i32
    %c0_i32_0 = arith.constant 0 : i32
    %c0_i32_1 = arith.constant 0 : i32
    return %arg0, %c0_i32, %c0_i32_0 : i32, i32, i32
  }
  func.func @transform_1(%arg0: i32) -> (i32, i32, i32) {
    %c0_i32 = arith.constant 0 : i32
    %c0_i32_0 = arith.constant 0 : i32
    %c0_i32_1 = arith.constant 0 : i32
    %c0_i32_2 = arith.constant 0 : i32
    return %c0_i32, %c0_i32_0, %c0_i32_1 : i32, i32, i32
  }
  func.func @transform_2(%arg0: i32) -> (i32, i32) {
    %c0_i32 = arith.constant 0 : i32
    %c0_i32_0 = arith.constant 0 : i32
    %c0_i32_1 = arith.constant 0 : i32
    return %c0_i32, %c0_i32_0 : i32, i32
  }
  func.func @transform_3(%arg0: i32) -> (i32, i32, i32) {
    %c0_i32 = arith.constant 0 : i32
    %c0_i32_0 = arith.constant 0 : i32
    %c0_i32_1 = arith.constant 0 : i32
    return %arg0, %c0_i32, %c0_i32_0 : i32, i32, i32
  }
}

</mosaic_0001>

<llo_original>
// kernel: basic_conv_forward.1
$region0: #{basic_conv_forward.1}
  #allocation0 [shape = 'u32[]', space=smem, size = 0x4, offset = 0x4, fixed_abs, tag = 'smem constant byte address 0x4 - core index']
  #allocation1 [shape = 'u32[72,128]{1,0:T(1,128)}', space=vmem, size = 0x9000, scoped, tag = 'internal scratch']
  %s0 = inlined_call_operand.vmem [shape: bf16[2,4,384], index: 0, kind: input, shape index: {}]
  %s1 = inlined_call_operand.vmem [shape: bf16[9,32,4], index: 1, kind: input, shape index: {}]
  %s2 = inlined_call_operand.vmem [shape: f32[32,1], index: 2, kind: input, shape index: {}]
  %s3 = inlined_call_operand.vmem [shape: f32[2,32,288], index: 3, kind: output, shape index: {}]
  %s4 = sld [smem:[#allocation0]]
  $region45: #{basic_conv_forward.1} parent=0
    _
  %s6 = ssub.s32 1, %s4
  %s7 = scalar_select 0, %s6, %s4
  loop: start=0, step=1, limit=4
  $region2: #{basic_conv_forward.1} parent=0 // loop_pre_header
    _
  $region3: #{basic_conv_forward.1} parent=0 // loop_header
    %s9 = sphi 0, %s13
    %p10 = scmp.ge.s32.totalorder %s9, 4
    %s19 = sphi 0, %s21
    %s22 = sphi 0, %s19
    %s23 = sphi 0, %s22
    %s39 = sphi 0, %s23
    %s43 = sphi 0, %s43
    %s45 = sphi 0, %s43
    %s46 = sphi 0, %s45
    %s60 = sphi 0, %s46
    %s64 = sphi 0, %s64
    %s66 = sphi 0, %s64
    %s67 = sphi 0, %s66
    %s81 = sphi 0, %s67
    %s87 = sphi 0, %s89
    %s90 = sphi 0, %s87
    %s91 = sphi 0, %s90
    %s107 = sphi 0, %s91
  $region4: #{basic_conv_forward.1} parent=0 // loop_header_branch
    %12 = sbr.rel (%p10) target = $region8
  $region5: #{basic_conv_forward.1} parent=0 // loop_body
    %s14 = ssub.s32 %s9, 1
    %s15 = ssub.s32 %s9, 2
    %s16 = sadd.s32 %s9, 1
    %s17 = ssub.s32 %s9, %s16
    %p18 = scmp.eq.s32.totalorder %s17, 0
    %s20 = sadd.s32 %s19, 1
    %s21 = scalar_select %p18, %s19, %s20
    %p24 = pneg %p18
    %p25 = scmp.eq.s32.totalorder %s9, 1
    %p26 = por %p24, %p25
    %p27 = scmp.ne.s32.totalorder %s19, %s22
    %p28 = scmp.eq.s32.totalorder %s9, 0
    %p29 = por %p27, %p28
    %p30 = scmp.ne.s32.totalorder %s19, %s22
    %p31 = scmp.eq.s32.totalorder %s14, 1
    %p32 = por %p30, %p31
    %p33 = scmp.ne.s32.totalorder %s22, %s23
    %p34 = scmp.eq.s32.totalorder %s14, 0
    %p35 = por %p33, %p34
    %p36 = scmp.ne.s32.totalorder %s22, %s23
    %p37 = scmp.eq.s32.totalorder %s15, 1
    %p38 = por %p36, %p37
    %p40 = scmp.ne.s32.totalorder %s23, %s39
    %p41 = scmp.eq.s32.totalorder %s15, 0
    %p42 = por %p40, %p41
    %s44 = sadd.s32 %s43, 1
    %p47 = scmp.eq.s32.totalorder %s9, 1
    %p48 = scmp.ne.s32.totalorder %s43, %s45
    %p49 = scmp.eq.s32.totalorder %s9, 0
    %p50 = por %p48, %p49
    %p51 = scmp.ne.s32.totalorder %s43, %s45
    %p52 = scmp.eq.s32.totalorder %s14, 1
    %p53 = por %p51, %p52
    %p54 = scmp.ne.s32.totalorder %s45, %s46
    %p55 = scmp.eq.s32.totalorder %s14, 0
    %p56 = por %p54, %p55
    %p57 = scmp.ne.s32.totalorder %s45, %s46
    %p58 = scmp.eq.s32.totalorder %s15, 1
    %p59 = por %p57, %p58
    %p61 = scmp.ne.s32.totalorder %s46, %s60
    %p62 = scmp.eq.s32.totalorder %s15, 0
    %p63 = por %p61, %p62
    %s65 = sadd.s32 %s64, 1
    %p68 = scmp.eq.s32.totalorder %s9, 1
    %p69 = scmp.ne.s32.totalorder %s64, %s66
    %p70 = scmp.eq.s32.totalorder %s9, 0
    %p71 = por %p69, %p70
    %p72 = scmp.ne.s32.totalorder %s64, %s66
    %p73 = scmp.eq.s32.totalorder %s14, 1
    %p74 = por %p72, %p73
    %p75 = scmp.ne.s32.totalorder %s66, %s67
    %p76 = scmp.eq.s32.totalorder %s14, 0
    %p77 = por %p75, %p76
    %p78 = scmp.ne.s32.totalorder %s66, %s67
    %p79 = scmp.eq.s32.totalorder %s15, 1
    %p80 = por %p78, %p79
    %p82 = scmp.ne.s32.totalorder %s67, %s81
    %p83 = scmp.eq.s32.totalorder %s15, 0
    %p84 = por %p82, %p83
    %s85 = ssub.s32 %s9, %s16
    %p86 = scmp.eq.s32.totalorder %s85, 0
    %s88 = sadd.s32 %s87, 1
    %s89 = scalar_select %p86, %s87, %s88
    %p92 = pneg %p86
    %p93 = scmp.eq.s32.totalorder %s9, 1
    %p94 = por %p92, %p93
    %p95 = scmp.ne.s32.totalorder %s87, %s90
    %p96 = scmp.eq.s32.totalorder %s9, 0
    %p97 = por %p95, %p96
    %p98 = scmp.ne.s32.totalorder %s87, %s90
    %p99 = scmp.eq.s32.totalorder %s14, 1
    %p100 = por %p98, %p99
    %p101 = scmp.ne.s32.totalorder %s90, %s91
    %p102 = scmp.eq.s32.totalorder %s14, 0
    %p103 = por %p101, %p102
    %p104 = scmp.ne.s32.totalorder %s90, %s91
    %p105 = scmp.eq.s32.totalorder %s15, 1
    %p106 = por %p104, %p105
    %p108 = scmp.ne.s32.totalorder %s91, %s107
    %p109 = scmp.eq.s32.totalorder %s15, 0
    %p110 = por %p108, %p109
    %p111 = scmp.le.s32.totalorder 1, %s9
    %p112 = scmp.lt.s32.totalorder %s9, 3
    %p113 = pnand %p111, %p112
    %p114 = pneg %p113
    // Predicated region
    $region9: #{basic_conv_forward.1} parent=5 // pred_check
      _
    $region10: #{basic_conv_forward.1} parent=5 // pred_check_branch
      %116 = sbr.rel (%p113) target = $region12
    $region11: #{basic_conv_forward.1} parent=5 // pred_region
      %s117 = ssub.s32 %s9, 1
      // Predicated region
      $region13: #{basic_conv_forward.1} parent=11 // pred_check
        %p118 = pneg %p56
      $region14: #{basic_conv_forward.1} parent=11 // pred_check_branch
        %120 = sbr.rel (%p118) target = $region16
      $region15: #{basic_conv_forward.1} parent=11 // pred_region
        _
      $region16: #{basic_conv_forward.1} parent=11 // pred_fallthru
        _
      // Predicated region
      $region17: #{basic_conv_forward.1} parent=11 // pred_check
        %p121 = pneg %p77
      $region18: #{basic_conv_forward.1} parent=11 // pred_check_branch
        %123 = sbr.rel (%p121) target = $region20
      $region19: #{basic_conv_forward.1} parent=11 // pred_region
        _
      $region20: #{basic_conv_forward.1} parent=11 // pred_fallthru
        _
    $region12: #{basic_conv_forward.1} parent=5 // pred_fallthru
      _
    %p124 = scmp.lt.s32.totalorder %s9, 2
    // Predicated region
    $region21: #{basic_conv_forward.1} parent=5 // pred_check
      %p125 = pneg %p124
    $region22: #{basic_conv_forward.1} parent=5 // pred_check_branch
      %127 = sbr.rel (%p125) target = $region24
    $region23: #{basic_conv_forward.1} parent=5 // pred_region
      // Predicated region
      $region25: #{basic_conv_forward.1} parent=23 // pred_check
        %p128 = pneg %p29
      $region26: #{basic_conv_forward.1} parent=23 // pred_check_branch
        %130 = sbr.rel (%p128) target = $region28
      $region27: #{basic_conv_forward.1} parent=23 // pred_region
        %p131 = scmp.lt.s32.totalorder %s9, 1
        %s132 = scalar_select %p131, %s9, 1
        %s133 = smul.addr %s132, 3
        %s134 = smul.addr %s133, 2
        %s135 = scalar_lea.vmem %s0, %s134
      $region28: #{basic_conv_forward.1} parent=23 // pred_fallthru
        _
    $region24: #{basic_conv_forward.1} parent=5 // pred_fallthru
      _
    %p136 = scmp.le.s32.totalorder 1, %s9
    %p137 = scmp.lt.s32.totalorder %s9, 3
    %p138 = pnand %p136, %p137
    %p139 = pneg %p138
    // Predicated region
    $region29: #{basic_conv_forward.1} parent=5 // pred_check
      _
    $region30: #{basic_conv_forward.1} parent=5 // pred_check_branch
      %141 = sbr.rel (%p138) target = $region32
    $region31: #{basic_conv_forward.1} parent=5 // pred_region
      %s142 = ssub.s32 %s9, 1
      %p143 = scmp.lt.s32.totalorder %s14, 1
      %s144 = scalar_select %p143, %s14, 1
      %s145 = smul.addr %s144, 3
      %s146 = smul.addr %s145, 2
      %s147 = scalar_lea.vmem %s0, %s146
      %p148 = pneg %p35
      %p149 = pneg %p32
      %p150 = pneg %p56
      %p151 = pneg %p53
      %p152 = pneg %p77
      %p153 = pneg %p74
      %p154 = pneg %p103
      %p155 = pneg %p100
      %p156 = scmp.lt.s32.totalorder %s14, 1
      %s157 = scalar_select %p156, %s14, 1
      %s158 = smul.addr %s157, 12
      %s159 = smul.addr %s158, 8
      %s160 = scalar_lea.vmem %s3, %s159
      %p161 = scmp.lt.s32.totalorder %s14, 1
      %s162 = scalar_select %p161, %s14, 1
      %s163 = smul.addr %s162, 3
      %s164 = smul.addr %s163, 2
      %s165 = scalar_lea.vmem %s0, %s164
      %p166 = scmp.lt.s32.totalorder %s14, 1
      %s167 = scalar_select %p166, %s14, 1
      %s168 = smul.addr %s167, 12
      %s169 = smul.addr %s168, 8
      %s170 = scalar_lea.vmem %s3, %s169
      %v172 = vld [vmem:[%s165] sm:$0x3f]
      %v173 = vld [vmem:[%s1] sm:$0xf]
      %v174 = vld [vmem:[%s1 + $0x4] sm:$0xf]
      %v175 = vld [vmem:[%s1 + $0x8] sm:$0xf]
      %v176 = vld [vmem:[%s1 + $0xc] sm:$0xf]
      %s177 = scalar_lea.vmem %s1, 16
      %v178 = vld [vmem:[%s177] sm:$0xf]
      %v179 = vld [vmem:[%s177 + $0x4] sm:$0xf]
      %v180 = vld [vmem:[%s177 + $0x8] sm:$0xf]
      %v181 = vld [vmem:[%s177 + $0xc] sm:$0xf]
      %v186 = vunpack.c.l.b16 %v178
      %v187 = vunpack.c.l.b16 %v179
      %v188 = vunpack.c.l.b16 %v180
      %v189 = vunpack.c.l.b16 %v181
      %v190 = vpack.c.b16 %v187, %v186
      %v191 = vpack.c.b16 %v189, %v188
      %193 = vst [vmem:[#allocation1] ss:$4 sm:$0xff] %v172
      %v194 = vld.sshfl [vmem:[#allocation1] sm:$0xff pattern:$0x73625140]
      %v196 = vld.sshfl [vmem:[#allocation1 + $0x8] sm:$0xff pattern:$0x73625140]
      %v198 = vld.sshfl [vmem:[#allocation1 + $0x10] sm:$0xff pattern:$0x73625140]
      %200 = vrot.lane.b32.xlu0 %v194, 127
      %v201 = vpop.permute.xlu0 %200
      %202 = vrot.lane.b32.xlu0 %v196, 127
      %v203 = vpop.permute.xlu0 %202
      %204 = vrot.lane.b32.xlu0 %v198, 127
      %v205 = vpop.permute.xlu0 %204
      %vm206 = vcmask 1039360
      %v207 = vsel %vm206, %v201, %v203
      %v208 = vsel %vm206, %v203, %v205
      %vm209 = vcmask 31744
      %v211 = vsel %vm209, %v190, 0
      %v214 = vsel %vm209, %v191, 0
      %vm216 = vcmask 1041408
      %v218 = vsel %vm216, %v207, 0
      %v221 = vsel %vm216, %v208, 0
      %v224 = vsel %vm216, %v205, 0
      %226 = vmatpush.bf16.msra.mxu0 0
      %227 = vmatpush.bf16.msra.mxu0 0
      %228 = vmatpush.bf16.msra.mxu0 0
      %229 = vmatpush.bf16.msra.mxu0 0
      %230 = vmatpush.bf16.msra.mxu0 0
      %231 = vmatpush.bf16.msra.mxu0 0
      %232 = vmatpush.bf16.msra.mxu0 0
      %233 = vmatpush.bf16.msra.mxu0 %v218
      %234 = vmatmul.bf16.gmra.mxu0 %v211
      %v235 = vpop.f32.mrf.mxu0
      %v236 = vadd.f32 0.0, %v235
      %v237 = vpop.f32.mrf.mxu0
      %v238 = vadd.f32 0.0, %v237
      %239 = vmatmul.bf16.gmra.mxu0 %v214
      %v240 = vpop.f32.mrf.mxu0
      %v241 = vadd.f32 0.0, %v240
      %v242 = vpop.f32.mrf.mxu0
      %v243 = vadd.f32 0.0, %v242
      %244 = vdwg.mxu0
      %245 = vmatpush.bf16.msra.mxu0 0
      %246 = vmatpush.bf16.msra.mxu0 0
      %247 = vmatpush.bf16.msra.mxu0 0
      %248 = vmatpush.bf16.msra.mxu0 0
      %249 = vmatpush.bf16.msra.mxu0 0
      %250 = vmatpush.bf16.msra.mxu0 0
      %251 = vmatpush.bf16.msra.mxu0 0
      %252 = vmatpush.bf16.msra.mxu0 %v221
      %253 = vmatmul.bf16.gmra.mxu0 %v211
      %v254 = vpop.f32.mrf.mxu0
      %v255 = vadd.f32 0.0, %v254
      %v256 = vpop.f32.mrf.mxu0
      %v257 = vadd.f32 0.0, %v256
      %258 = vmatmul.bf16.gmra.mxu0 %v214
      %v259 = vpop.f32.mrf.mxu0
      %v260 = vadd.f32 0.0, %v259
      %v261 = vpop.f32.mrf.mxu0
      %v262 = vadd.f32 0.0, %v261
      %263 = vdwg.mxu0
      %264 = vmatpush.bf16.msra.mxu0 0
      %265 = vmatpush.bf16.msra.mxu0 0
      %266 = vmatpush.bf16.msra.mxu0 0
      %267 = vmatpush.bf16.msra.mxu0 0
      %268 = vmatpush.bf16.msra.mxu0 0
      %269 = vmatpush.bf16.msra.mxu0 0
      %270 = vmatpush.bf16.msra.mxu0 0
      %271 = vmatpush.bf16.msra.mxu0 %v224
      %272 = vmatmul.bf16.gmra.mxu0 %v211
      %v273 = vpop.f32.mrf.mxu0
      %v274 = vadd.f32 0.0, %v273
      %v275 = vpop.f32.mrf.mxu0
      %v276 = vadd.f32 0.0, %v275
      %277 = vmatmul.bf16.gmra.mxu0 %v214
      %v278 = vpop.f32.mrf.mxu0
      %v279 = vadd.f32 0.0, %v278
      %v280 = vpop.f32.mrf.mxu0
      %v281 = vadd.f32 0.0, %v280
      %282 = vdwg.mxu0
      %v287 = vunpack.c.l.b16 %v173
      %v288 = vunpack.c.l.b16 %v174
      %v289 = vunpack.c.l.b16 %v175
      %v290 = vunpack.c.l.b16 %v176
      %v291 = vpack.c.b16 %v288, %v287
      %v292 = vpack.c.b16 %v290, %v289
      %293 = vst [vmem:[#allocation1] ss:$4 sm:$0xff] %v172
      %v294 = vld.sshfl [vmem:[#allocation1] sm:$0xff pattern:$0x73625140]
      %v295 = vld.sshfl [vmem:[#allocation1 + $0x8] sm:$0xff pattern:$0x73625140]
      %v296 = vld.sshfl [vmem:[#allocation1 + $0x10] sm:$0xff pattern:$0x73625140]
      %v298 = vsel %vm209, %v291, 0
      %v301 = vsel %vm209, %v292, 0
      %v303 = vsel %vm216, %v294, 0
      %v305 = vsel %vm216, %v295, 0
      %v307 = vsel %vm216, %v296, 0
      %309 = vmatpush.bf16.msra.mxu0 0
      %310 = vmatpush.bf16.msra.mxu0 0
      %311 = vmatpush.bf16.msra.mxu0 0
      %312 = vmatpush.bf16.msra.mxu0 0
      %313 = vmatpush.bf16.msra.mxu0 0
      %314 = vmatpush.bf16.msra.mxu0 0
      %315 = vmatpush.bf16.msra.mxu0 0
      %316 = vmatpush.bf16.msra.mxu0 %v303
      %317 = vmatmul.bf16.gmra.mxu0 %v298
      %v318 = vpop.f32.mrf.mxu0
      %v319 = vadd.f32 %v236, %v318
      %v320 = vpop.f32.mrf.mxu0
      %v321 = vadd.f32 %v238, %v320
      %322 = vmatmul.bf16.gmra.mxu0 %v301
      %v323 = vpop.f32.mrf.mxu0
      %v324 = vadd.f32 %v241, %v323
      %v325 = vpop.f32.mrf.mxu0
      %v326 = vadd.f32 %v243, %v325
      %327 = vdwg.mxu0
      %328 = vmatpush.bf16.msra.mxu0 0
      %329 = vmatpush.bf16.msra.mxu0 0
      %330 = vmatpush.bf16.msra.mxu0 0
      %331 = vmatpush.bf16.msra.mxu0 0
      %332 = vmatpush.bf16.msra.mxu0 0
      %333 = vmatpush.bf16.msra.mxu0 0
      %334 = vmatpush.bf16.msra.mxu0 0
      %335 = vmatpush.bf16.msra.mxu0 %v305
      %336 = vmatmul.bf16.gmra.mxu0 %v298
      %v337 = vpop.f32.mrf.mxu0
      %v338 = vadd.f32 %v255, %v337
      %v339 = vpop.f32.mrf.mxu0
      %v340 = vadd.f32 %v257, %v339
      %341 = vmatmul.bf16.gmra.mxu0 %v301
      %v342 = vpop.f32.mrf.mxu0
      %v343 = vadd.f32 %v260, %v342
      %v344 = vpop.f32.mrf.mxu0
      %v345 = vadd.f32 %v262, %v344
      %346 = vdwg.mxu0
      %347 = vmatpush.bf16.msra.mxu0 0
      %348 = vmatpush.bf16.msra.mxu0 0
      %349 = vmatpush.bf16.msra.mxu0 0
      %350 = vmatpush.bf16.msra.mxu0 0
      %351 = vmatpush.bf16.msra.mxu0 0
      %352 = vmatpush.bf16.msra.mxu0 0
      %353 = vmatpush.bf16.msra.mxu0 0
      %354 = vmatpush.bf16.msra.mxu0 %v307
      %355 = vmatmul.bf16.gmra.mxu0 %v298
      %v356 = vpop.f32.mrf.mxu0
      %v357 = vadd.f32 %v274, %v356
      %v358 = vpop.f32.mrf.mxu0
      %v359 = vadd.f32 %v276, %v358
      %360 = vmatmul.bf16.gmra.mxu0 %v301
      %v361 = vpop.f32.mrf.mxu0
      %v362 = vadd.f32 %v279, %v361
      %v363 = vpop.f32.mrf.mxu0
      %v364 = vadd.f32 %v281, %v363
      %365 = vdwg.mxu0
      %v366 = vld [vmem:[%s165] sm:$0x3f]
      %s367 = scalar_lea.vmem %s1, 32
      %v368 = vld [vmem:[%s367] sm:$0xf]
      %v369 = vld [vmem:[%s367 + $0x4] sm:$0xf]
      %v370 = vld [vmem:[%s367 + $0x8] sm:$0xf]
      %v371 = vld [vmem:[%s367 + $0xc] sm:$0xf]
      %v376 = vunpack.c.l.b16 %v368
      %v377 = vunpack.c.l.b16 %v369
      %v378 = vunpack.c.l.b16 %v370
      %v379 = vunpack.c.l.b16 %v371
      %v380 = vpack.c.b16 %v377, %v376
      %v381 = vpack.c.b16 %v379, %v378
      %383 = vst [vmem:[#allocation1] ss:$4 sm:$0xff] %v366
      %v384 = vld.sshfl [vmem:[#allocation1] sm:$0xff pattern:$0x73625140]
      %v386 = vld.sshfl [vmem:[#allocation1 + $0x8] sm:$0xff pattern:$0x73625140]
      %v388 = vld.sshfl [vmem:[#allocation1 + $0x10] sm:$0xff pattern:$0x73625140]
      %390 = vrot.lane.b32.xlu0 %v384, 126
      %v391 = vpop.permute.xlu0 %390
      %392 = vrot.lane.b32.xlu0 %v386, 126
      %v393 = vpop.permute.xlu0 %392
      %394 = vrot.lane.b32.xlu0 %v388, 126
      %v395 = vpop.permute.xlu0 %394
      %vm396 = vcmask 1031168
      %v397 = vsel %vm396, %v391, %v393
      %v398 = vsel %vm396, %v393, %v395
      %v400 = vsel %vm209, %v380, 0
      %v403 = vsel %vm209, %v381, 0
      %v406 = vsel %vm216, %v397, 0
      %v409 = vsel %vm216, %v398, 0
      %v412 = vsel %vm216, %v395, 0
      %414 = vmatpush.bf16.msra.mxu0 0
      %415 = vmatpush.bf16.msra.mxu0 0
      %416 = vmatpush.bf16.msra.mxu0 0
      %417 = vmatpush.bf16.msra.mxu0 0
      %418 = vmatpush.bf16.msra.mxu0 0
      %419 = vmatpush.bf16.msra.mxu0 0
      %420 = vmatpush.bf16.msra.mxu0 0
      %421 = vmatpush.bf16.msra.mxu0 %v406
      %422 = vmatmul.bf16.gmra.mxu0 %v400
      %v423 = vpop.f32.mrf.mxu0
      %v424 = vadd.f32 0.0, %v423
      %v425 = vpop.f32.mrf.mxu0
      %v426 = vadd.f32 0.0, %v425
      %427 = vmatmul.bf16.gmra.mxu0 %v403
      %v428 = vpop.f32.mrf.mxu0
      %v429 = vadd.f32 0.0, %v428
      %v430 = vpop.f32.mrf.mxu0
      %v431 = vadd.f32 0.0, %v430
      %432 = vdwg.mxu0
      %433 = vmatpush.bf16.msra.mxu0 0
      %434 = vmatpush.bf16.msra.mxu0 0
      %435 = vmatpush.bf16.msra.mxu0 0
      %436 = vmatpush.bf16.msra.mxu0 0
      %437 = vmatpush.bf16.msra.mxu0 0
      %438 = vmatpush.bf16.msra.mxu0 0
      %439 = vmatpush.bf16.msra.mxu0 0
      %440 = vmatpush.bf16.msra.mxu0 %v409
      %441 = vmatmul.bf16.gmra.mxu0 %v400
      %v442 = vpop.f32.mrf.mxu0
      %v443 = vadd.f32 0.0, %v442
      %v444 = vpop.f32.mrf.mxu0
      %v445 = vadd.f32 0.0, %v444
      %446 = vmatmul.bf16.gmra.mxu0 %v403
      %v447 = vpop.f32.mrf.mxu0
      %v448 = vadd.f32 0.0, %v447
      %v449 = vpop.f32.mrf.mxu0
      %v450 = vadd.f32 0.0, %v449
      %451 = vdwg.mxu0
      %452 = vmatpush.bf16.msra.mxu0 0
      %453 = vmatpush.bf16.msra.mxu0 0
      %454 = vmatpush.bf16.msra.mxu0 0
      %455 = vmatpush.bf16.msra.mxu0 0
      %456 = vmatpush.bf16.msra.mxu0 0
      %457 = vmatpush.bf16.msra.mxu0 0
      %458 = vmatpush.bf16.msra.mxu0 0
      %459 = vmatpush.bf16.msra.mxu0 %v412
      %460 = vmatmul.bf16.gmra.mxu0 %v400
      %v461 = vpop.f32.mrf.mxu0
      %v462 = vadd.f32 0.0, %v461
      %v463 = vpop.f32.mrf.mxu0
      %v464 = vadd.f32 0.0, %v463
      %465 = vmatmul.bf16.gmra.mxu0 %v403
      %v466 = vpop.f32.mrf.mxu0
      %v467 = vadd.f32 0.0, %v466
      %v468 = vpop.f32.mrf.mxu0
      %v469 = vadd.f32 0.0, %v468
      %470 = vdwg.mxu0
      %v471 = vadd.f32 %v319, %v424
      %v472 = vadd.f32 %v338, %v443
      %v473 = vadd.f32 %v357, %v462
      %v474 = vadd.f32 %v321, %v426
      %v475 = vadd.f32 %v340, %v445
      %v476 = vadd.f32 %v359, %v464
      %v477 = vadd.f32 %v324, %v429
      %v478 = vadd.f32 %v343, %v448
      %v479 = vadd.f32 %v362, %v467
      %v480 = vadd.f32 %v326, %v431
      %v481 = vadd.f32 %v345, %v450
      %v482 = vadd.f32 %v364, %v469
      %v483 = vld [vmem:[%s165] sm:$0x3f]
      %s484 = scalar_lea.vmem %s1, 48
      %v485 = vld [vmem:[%s484] sm:$0xf]
      %v486 = vld [vmem:[%s484 + $0x4] sm:$0xf]
      %v487 = vld [vmem:[%s484 + $0x8] sm:$0xf]
      %v488 = vld [vmem:[%s484 + $0xc] sm:$0xf]
      %v493 = vunpack.c.l.b16 %v485
      %v494 = vunpack.c.l.b16 %v486
      %v495 = vunpack.c.l.b16 %v487
      %v496 = vunpack.c.l.b16 %v488
      %v497 = vpack.c.b16 %v494, %v493
      %v498 = vpack.c.b16 %v496, %v495
      %500 = vst [vmem:[#allocation1] ss:$4 sm:$0xff] %v483
      %v501 = vld.sshfl [vmem:[#allocation1] sm:$0xff pattern:$0x73625140]
      %v503 = vld.sshfl [vmem:[#allocation1 + $0x8] sm:$0xff pattern:$0x73625140]
      %v505 = vld.sshfl [vmem:[#allocation1 + $0x10] sm:$0xff pattern:$0x73625140]
      %507 = vrot.lane.b32.xlu0 %v501, 110
      %v508 = vpop.permute.xlu0 %507
      %509 = vrot.lane.b32.xlu0 %v503, 110
      %v510 = vpop.permute.xlu0 %509
      %511 = vrot.lane.b32.xlu0 %v505, 110
      %v512 = vpop.permute.xlu0 %511
      %vm513 = vcmask 900096
      %v514 = vsel %vm513, %v508, %v510
      %v515 = vsel %vm513, %v510, %v512
      %v517 = vsel %vm209, %v497, 0
      %v520 = vsel %vm209, %v498, 0
      %v523 = vsel %vm216, %v514, 0
      %v526 = vsel %vm216, %v515, 0
      %v529 = vsel %vm216, %v512, 0
      %531 = vmatpush.bf16.msra.mxu0 0
      %532 = vmatpush.bf16.msra.mxu0 0
      %533 = vmatpush.bf16.msra.mxu0 0
      %534 = vmatpush.bf16.msra.mxu0 0
      %535 = vmatpush.bf16.msra.mxu0 0
      %536 = vmatpush.bf16.msra.mxu0 0
      %537 = vmatpush.bf16.msra.mxu0 0
      %538 = vmatpush.bf16.msra.mxu0 %v523
      %539 = vmatmul.bf16.gmra.mxu0 %v517
      %v540 = vpop.f32.mrf.mxu0
      %v541 = vadd.f32 0.0, %v540
      %v542 = vpop.f32.mrf.mxu0
      %v543 = vadd.f32 0.0, %v542
      %544 = vmatmul.bf16.gmra.mxu0 %v520
      %v545 = vpop.f32.mrf.mxu0
      %v546 = vadd.f32 0.0, %v545
      %v547 = vpop.f32.mrf.mxu0
      %v548 = vadd.f32 0.0, %v547
      %549 = vdwg.mxu0
      %550 = vmatpush.bf16.msra.mxu0 0
      %551 = vmatpush.bf16.msra.mxu0 0
      %552 = vmatpush.bf16.msra.mxu0 0
      %553 = vmatpush.bf16.msra.mxu0 0
      %554 = vmatpush.bf16.msra.mxu0 0
      %555 = vmatpush.bf16.msra.mxu0 0
      %556 = vmatpush.bf16.msra.mxu0 0
      %557 = vmatpush.bf16.msra.mxu0 %v526
      %558 = vmatmul.bf16.gmra.mxu0 %v517
      %v559 = vpop.f32.mrf.mxu0
      %v560 = vadd.f32 0.0, %v559
      %v561 = vpop.f32.mrf.mxu0
      %v562 = vadd.f32 0.0, %v561
      %563 = vmatmul.bf16.gmra.mxu0 %v520
      %v564 = vpop.f32.mrf.mxu0
      %v565 = vadd.f32 0.0, %v564
      %v566 = vpop.f32.mrf.mxu0
      %v567 = vadd.f32 0.0, %v566
      %568 = vdwg.mxu0
      %569 = vmatpush.bf16.msra.mxu0 0
      %570 = vmatpush.bf16.msra.mxu0 0
      %571 = vmatpush.bf16.msra.mxu0 0
      %572 = vmatpush.bf16.msra.mxu0 0
      %573 = vmatpush.bf16.msra.mxu0 0
      %574 = vmatpush.bf16.msra.mxu0 0
      %575 = vmatpush.bf16.msra.mxu0 0
      %576 = vmatpush.bf16.msra.mxu0 %v529
      %577 = vmatmul.bf16.gmra.mxu0 %v517
      %v578 = vpop.f32.mrf.mxu0
      %v579 = vadd.f32 0.0, %v578
      %v580 = vpop.f32.mrf.mxu0
      %v581 = vadd.f32 0.0, %v580
      %582 = vmatmul.bf16.gmra.mxu0 %v520
      %v583 = vpop.f32.mrf.mxu0
      %v584 = vadd.f32 0.0, %v583
      %v585 = vpop.f32.mrf.mxu0
      %v586 = vadd.f32 0.0, %v585
      %587 = vdwg.mxu0
      %v588 = vadd.f32 %v471, %v541
      %v589 = vadd.f32 %v472, %v560
      %v590 = vadd.f32 %v473, %v579
      %v591 = vadd.f32 %v474, %v543
      %v592 = vadd.f32 %v475, %v562
      %v593 = vadd.f32 %v476, %v581
      %v594 = vadd.f32 %v477, %v546
      %v595 = vadd.f32 %v478, %v565
      %v596 = vadd.f32 %v479, %v584
      %v597 = vadd.f32 %v480, %v548
      %v598 = vadd.f32 %v481, %v567
      %v599 = vadd.f32 %v482, %v586
      %v600 = vld [vmem:[%s165] sm:$0x3f]
      %s601 = scalar_lea.vmem %s1, 64
      %v602 = vld [vmem:[%s601] sm:$0xf]
      %v603 = vld [vmem:[%s601 + $0x4] sm:$0xf]
      %v604 = vld [vmem:[%s601 + $0x8] sm:$0xf]
      %v605 = vld [vmem:[%s601 + $0xc] sm:$0xf]
      %v610 = vunpack.c.l.b16 %v602
      %v611 = vunpack.c.l.b16 %v603
      %v612 = vunpack.c.l.b16 %v604
      %v613 = vunpack.c.l.b16 %v605
      %v614 = vpack.c.b16 %v611, %v610
      %v615 = vpack.c.b16 %v613, %v612
      %617 = vst [vmem:[#allocation1] ss:$4 sm:$0xff] %v600
      %v618 = vld.sshfl [vmem:[#allocation1] sm:$0xff pattern:$0x73625140]
      %v620 = vld.sshfl [vmem:[#allocation1 + $0x8] sm:$0xff pattern:$0x73625140]
      %v622 = vld.sshfl [vmem:[#allocation1 + $0x10] sm:$0xff pattern:$0x73625140]
      %624 = vrot.lane.b32.xlu0 %v618, 109
      %v625 = vpop.permute.xlu0 %624
      %626 = vrot.lane.b32.xlu0 %v620, 109
      %v627 = vpop.permute.xlu0 %626
      %628 = vrot.lane.b32.xlu0 %v622, 109
      %v629 = vpop.permute.xlu0 %628
      %vm630 = vcmask 891904
      %v631 = vsel %vm630, %v625, %v627
      %v632 = vsel %vm630, %v627, %v629
      %v634 = vsel %vm209, %v614, 0
      %v637 = vsel %vm209, %v615, 0
      %v640 = vsel %vm216, %v631, 0
      %v643 = vsel %vm216, %v632, 0
      %v646 = vsel %vm216, %v629, 0
      %648 = vmatpush.bf16.msra.mxu0 0
      %649 = vmatpush.bf16.msra.mxu0 0
      %650 = vmatpush.bf16.msra.mxu0 0
      %651 = vmatpush.bf16.msra.mxu0 0
      %652 = vmatpush.bf16.msra.mxu0 0
      %653 = vmatpush.bf16.msra.mxu0 0
      %654 = vmatpush.bf16.msra.mxu0 0
      %655 = vmatpush.bf16.msra.mxu0 %v640
      %656 = vmatmul.bf16.gmra.mxu0 %v634
      %v657 = vpop.f32.mrf.mxu0
      %v658 = vadd.f32 0.0, %v657
      %v659 = vpop.f32.mrf.mxu0
      %v660 = vadd.f32 0.0, %v659
      %661 = vmatmul.bf16.gmra.mxu0 %v637
      %v662 = vpop.f32.mrf.mxu0
      %v663 = vadd.f32 0.0, %v662
      %v664 = vpop.f32.mrf.mxu0
      %v665 = vadd.f32 0.0, %v664
      %666 = vdwg.mxu0
      %667 = vmatpush.bf16.msra.mxu0 0
      %668 = vmatpush.bf16.msra.mxu0 0
      %669 = vmatpush.bf16.msra.mxu0 0
      %670 = vmatpush.bf16.msra.mxu0 0
      %671 = vmatpush.bf16.msra.mxu0 0
      %672 = vmatpush.bf16.msra.mxu0 0
      %673 = vmatpush.bf16.msra.mxu0 0
      %674 = vmatpush.bf16.msra.mxu0 %v643
      %675 = vmatmul.bf16.gmra.mxu0 %v634
      %v676 = vpop.f32.mrf.mxu0
      %v677 = vadd.f32 0.0, %v676
      %v678 = vpop.f32.mrf.mxu0
      %v679 = vadd.f32 0.0, %v678
      %680 = vmatmul.bf16.gmra.mxu0 %v637
      %v681 = vpop.f32.mrf.mxu0
      %v682 = vadd.f32 0.0, %v681
      %v683 = vpop.f32.mrf.mxu0
      %v684 = vadd.f32 0.0, %v683
      %685 = vdwg.mxu0
      %686 = vmatpush.bf16.msra.mxu0 0
      %687 = vmatpush.bf16.msra.mxu0 0
      %688 = vmatpush.bf16.msra.mxu0 0
      %689 = vmatpush.bf16.msra.mxu0 0
      %690 = vmatpush.bf16.msra.mxu0 0
      %691 = vmatpush.bf16.msra.mxu0 0
      %692 = vmatpush.bf16.msra.mxu0 0
      %693 = vmatpush.bf16.msra.mxu0 %v646
      %694 = vmatmul.bf16.gmra.mxu0 %v634
      %v695 = vpop.f32.mrf.mxu0
      %v696 = vadd.f32 0.0, %v695
      %v697 = vpop.f32.mrf.mxu0
      %v698 = vadd.f32 0.0, %v697
      %699 = vmatmul.bf16.gmra.mxu0 %v637
      %v700 = vpop.f32.mrf.mxu0
      %v701 = vadd.f32 0.0, %v700
      %v702 = vpop.f32.mrf.mxu0
      %v703 = vadd.f32 0.0, %v702
      %704 = vdwg.mxu0
      %v705 = vadd.f32 %v588, %v658
      %v706 = vadd.f32 %v589, %v677
      %v707 = vadd.f32 %v590, %v696
      %v708 = vadd.f32 %v591, %v660
      %v709 = vadd.f32 %v592, %v679
      %v710 = vadd.f32 %v593, %v698
      %v711 = vadd.f32 %v594, %v663
      %v712 = vadd.f32 %v595, %v682
      %v713 = vadd.f32 %v596, %v701
      %v714 = vadd.f32 %v597, %v665
      %v715 = vadd.f32 %v598, %v684
      %v716 = vadd.f32 %v599, %v703
      %v717 = vld [vmem:[%s165] sm:$0x3f]
      %s718 = scalar_lea.vmem %s1, 80
      %v719 = vld [vmem:[%s718] sm:$0xf]
      %v720 = vld [vmem:[%s718 + $0x4] sm:$0xf]
      %v721 = vld [vmem:[%s718 + $0x8] sm:$0xf]
      %v722 = vld [vmem:[%s718 + $0xc] sm:$0xf]
      %v727 = vunpack.c.l.b16 %v719
      %v728 = vunpack.c.l.b16 %v720
      %v729 = vunpack.c.l.b16 %v721
      %v730 = vunpack.c.l.b16 %v722
      %v731 = vpack.c.b16 %v728, %v727
      %v732 = vpack.c.b16 %v730, %v729
      %734 = vst [vmem:[#allocation1] ss:$4 sm:$0xff] %v717
      %v735 = vld.sshfl [vmem:[#allocation1] sm:$0xff pattern:$0x73625140]
      %v737 = vld.sshfl [vmem:[#allocation1 + $0x8] sm:$0xff pattern:$0x73625140]
      %v739 = vld.sshfl [vmem:[#allocation1 + $0x10] sm:$0xff pattern:$0x73625140]
      %741 = vrot.lane.b32.xlu0 %v735, 108
      %v742 = vpop.permute.xlu0 %741
      %743 = vrot.lane.b32.xlu0 %v737, 108
      %v744 = vpop.permute.xlu0 %743
      %745 = vrot.lane.b32.xlu0 %v739, 108
      %v746 = vpop.permute.xlu0 %745
      %vm747 = vcmask 883712
      %v748 = vsel %vm747, %v742, %v744
      %v749 = vsel %vm747, %v744, %v746
      %v751 = vsel %vm209, %v731, 0
      %v754 = vsel %vm209, %v732, 0
      %v757 = vsel %vm216, %v748, 0
      %v760 = vsel %vm216, %v749, 0
      %v763 = vsel %vm216, %v746, 0
      %765 = vmatpush.bf16.msra.mxu0 0
      %766 = vmatpush.bf16.msra.mxu0 0
      %767 = vmatpush.bf16.msra.mxu0 0
      %768 = vmatpush.bf16.msra.mxu0 0
      %769 = vmatpush.bf16.msra.mxu0 0
      %770 = vmatpush.bf16.msra.mxu0 0
      %771 = vmatpush.bf16.msra.mxu0 0
      %772 = vmatpush.bf16.msra.mxu0 %v757
      %773 = vmatmul.bf16.gmra.mxu0 %v751
      %v774 = vpop.f32.mrf.mxu0
      %v775 = vadd.f32 0.0, %v774
      %v776 = vpop.f32.mrf.mxu0
      %v777 = vadd.f32 0.0, %v776
      %778 = vmatmul.bf16.gmra.mxu0 %v754
      %v779 = vpop.f32.mrf.mxu0
      %v780 = vadd.f32 0.0, %v779
      %v781 = vpop.f32.mrf.mxu0
      %v782 = vadd.f32 0.0, %v781
      %783 = vdwg.mxu0
      %784 = vmatpush.bf16.msra.mxu0 0
      %785 = vmatpush.bf16.msra.mxu0 0
      %786 = vmatpush.bf16.msra.mxu0 0
      %787 = vmatpush.bf16.msra.mxu0 0
      %788 = vmatpush.bf16.msra.mxu0 0
      %789 = vmatpush.bf16.msra.mxu0 0
      %790 = vmatpush.bf16.msra.mxu0 0
      %791 = vmatpush.bf16.msra.mxu0 %v760
      %792 = vmatmul.bf16.gmra.mxu0 %v751
      %v793 = vpop.f32.mrf.mxu0
      %v794 = vadd.f32 0.0, %v793
      %v795 = vpop.f32.mrf.mxu0
      %v796 = vadd.f32 0.0, %v795
      %797 = vmatmul.bf16.gmra.mxu0 %v754
      %v798 = vpop.f32.mrf.mxu0
      %v799 = vadd.f32 0.0, %v798
      %v800 = vpop.f32.mrf.mxu0
      %v801 = vadd.f32 0.0, %v800
      %802 = vdwg.mxu0
      %803 = vmatpush.bf16.msra.mxu0 0
      %804 = vmatpush.bf16.msra.mxu0 0
      %805 = vmatpush.bf16.msra.mxu0 0
      %806 = vmatpush.bf16.msra.mxu0 0
      %807 = vmatpush.bf16.msra.mxu0 0
      %808 = vmatpush.bf16.msra.mxu0 0
      %809 = vmatpush.bf16.msra.mxu0 0
      %810 = vmatpush.bf16.msra.mxu0 %v763
      %811 = vmatmul.bf16.gmra.mxu0 %v751
      %v812 = vpop.f32.mrf.mxu0
      %v813 = vadd.f32 0.0, %v812
      %v814 = vpop.f32.mrf.mxu0
      %v815 = vadd.f32 0.0, %v814
      %816 = vmatmul.bf16.gmra.mxu0 %v754
      %v817 = vpop.f32.mrf.mxu0
      %v818 = vadd.f32 0.0, %v817
      %v819 = vpop.f32.mrf.mxu0
      %v820 = vadd.f32 0.0, %v819
      %821 = vdwg.mxu0
      %v822 = vadd.f32 %v705, %v775
      %v823 = vadd.f32 %v706, %v794
      %v824 = vadd.f32 %v707, %v813
      %v825 = vadd.f32 %v708, %v777
      %v826 = vadd.f32 %v709, %v796
      %v827 = vadd.f32 %v710, %v815
      %v828 = vadd.f32 %v711, %v780
      %v829 = vadd.f32 %v712, %v799
      %v830 = vadd.f32 %v713, %v818
      %v831 = vadd.f32 %v714, %v782
      %v832 = vadd.f32 %v715, %v801
      %v833 = vadd.f32 %v716, %v820
      %v834 = vld [vmem:[%s165] sm:$0x3f]
      %s835 = scalar_lea.vmem %s1, 96
      %v836 = vld [vmem:[%s835] sm:$0xf]
      %v837 = vld [vmem:[%s835 + $0x4] sm:$0xf]
      %v838 = vld [vmem:[%s835 + $0x8] sm:$0xf]
      %v839 = vld [vmem:[%s835 + $0xc] sm:$0xf]
      %v844 = vunpack.c.l.b16 %v836
      %v845 = vunpack.c.l.b16 %v837
      %v846 = vunpack.c.l.b16 %v838
      %v847 = vunpack.c.l.b16 %v839
      %v848 = vpack.c.b16 %v845, %v844
      %v849 = vpack.c.b16 %v847, %v846
      %851 = vst [vmem:[#allocation1] ss:$4 sm:$0xff] %v834
      %v852 = vld.sshfl [vmem:[#allocation1] sm:$0xff pattern:$0x73625140]
      %v854 = vld.sshfl [vmem:[#allocation1 + $0x8] sm:$0xff pattern:$0x73625140]
      %v856 = vld.sshfl [vmem:[#allocation1 + $0x10] sm:$0xff pattern:$0x73625140]
      %858 = vrot.lane.b32.xlu0 %v852, 92
      %v859 = vpop.permute.xlu0 %858
      %860 = vrot.lane.b32.xlu0 %v854, 92
      %v861 = vpop.permute.xlu0 %860
      %862 = vrot.lane.b32.xlu0 %v856, 92
      %v863 = vpop.permute.xlu0 %862
      %vm864 = vcmask 752640
      %v865 = vsel %vm864, %v859, %v861
      %v866 = vsel %vm864, %v861, %v863
      %v868 = vsel %vm209, %v848, 0
      %v871 = vsel %vm209, %v849, 0
      %v874 = vsel %vm216, %v865, 0
      %v877 = vsel %vm216, %v866, 0
      %v880 = vsel %vm216, %v863, 0
      %882 = vmatpush.bf16.msra.mxu0 0
      %883 = vmatpush.bf16.msra.mxu0 0
      %884 = vmatpush.bf16.msra.mxu0 0
      %885 = vmatpush.bf16.msra.mxu0 0
      %886 = vmatpush.bf16.msra.mxu0 0
      %887 = vmatpush.bf16.msra.mxu0 0
      %888 = vmatpush.bf16.msra.mxu0 0
      %889 = vmatpush.bf16.msra.mxu0 %v874
      %890 = vmatmul.bf16.gmra.mxu0 %v868
      %v891 = vpop.f32.mrf.mxu0
      %v892 = vadd.f32 0.0, %v891
      %v893 = vpop.f32.mrf.mxu0
      %v894 = vadd.f32 0.0, %v893
      %895 = vmatmul.bf16.gmra.mxu0 %v871
      %v896 = vpop.f32.mrf.mxu0
      %v897 = vadd.f32 0.0, %v896
      %v898 = vpop.f32.mrf.mxu0
      %v899 = vadd.f32 0.0, %v898
      %900 = vdwg.mxu0
      %901 = vmatpush.bf16.msra.mxu0 0
      %902 = vmatpush.bf16.msra.mxu0 0
      %903 = vmatpush.bf16.msra.mxu0 0
      %904 = vmatpush.bf16.msra.mxu0 0
      %905 = vmatpush.bf16.msra.mxu0 0
      %906 = vmatpush.bf16.msra.mxu0 0
      %907 = vmatpush.bf16.msra.mxu0 0
      %908 = vmatpush.bf16.msra.mxu0 %v877
      %909 = vmatmul.bf16.gmra.mxu0 %v868
      %v910 = vpop.f32.mrf.mxu0
      %v911 = vadd.f32 0.0, %v910
      %v912 = vpop.f32.mrf.mxu0
      %v913 = vadd.f32 0.0, %v912
      %914 = vmatmul.bf16.gmra.mxu0 %v871
      %v915 = vpop.f32.mrf.mxu0
      %v916 = vadd.f32 0.0, %v915
      %v917 = vpop.f32.mrf.mxu0
      %v918 = vadd.f32 0.0, %v917
      %919 = vdwg.mxu0
      %920 = vmatpush.bf16.msra.mxu0 0
      %921 = vmatpush.bf16.msra.mxu0 0
      %922 = vmatpush.bf16.msra.mxu0 0
      %923 = vmatpush.bf16.msra.mxu0 0
      %924 = vmatpush.bf16.msra.mxu0 0
      %925 = vmatpush.bf16.msra.mxu0 0
      %926 = vmatpush.bf16.msra.mxu0 0
      %927 = vmatpush.bf16.msra.mxu0 %v880
      %928 = vmatmul.bf16.gmra.mxu0 %v868
      %v929 = vpop.f32.mrf.mxu0
      %v930 = vadd.f32 0.0, %v929
      %v931 = vpop.f32.mrf.mxu0
      %v932 = vadd.f32 0.0, %v931
      %933 = vmatmul.bf16.gmra.mxu0 %v871
      %v934 = vpop.f32.mrf.mxu0
      %v935 = vadd.f32 0.0, %v934
      %v936 = vpop.f32.mrf.mxu0
      %v937 = vadd.f32 0.0, %v936
      %938 = vdwg.mxu0
      %v939 = vadd.f32 %v822, %v892
      %v940 = vadd.f32 %v823, %v911
      %v941 = vadd.f32 %v824, %v930
      %v942 = vadd.f32 %v825, %v894
      %v943 = vadd.f32 %v826, %v913
      %v944 = vadd.f32 %v827, %v932
      %v945 = vadd.f32 %v828, %v897
      %v946 = vadd.f32 %v829, %v916
      %v947 = vadd.f32 %v830, %v935
      %v948 = vadd.f32 %v831, %v899
      %v949 = vadd.f32 %v832, %v918
      %v950 = vadd.f32 %v833, %v937
      %v951 = vld [vmem:[%s165] sm:$0x3f]
      %s952 = scalar_lea.vmem %s1, 112
      %v953 = vld [vmem:[%s952] sm:$0xf]
      %v954 = vld [vmem:[%s952 + $0x4] sm:$0xf]
      %v955 = vld [vmem:[%s952 + $0x8] sm:$0xf]
      %v956 = vld [vmem:[%s952 + $0xc] sm:$0xf]
      %v961 = vunpack.c.l.b16 %v953
      %v962 = vunpack.c.l.b16 %v954
      %v963 = vunpack.c.l.b16 %v955
      %v964 = vunpack.c.l.b16 %v956
      %v965 = vpack.c.b16 %v962, %v961
      %v966 = vpack.c.b16 %v964, %v963
      %968 = vst [vmem:[#allocation1] ss:$4 sm:$0xff] %v951
      %v969 = vld.sshfl [vmem:[#allocation1] sm:$0xff pattern:$0x73625140]
      %v971 = vld.sshfl [vmem:[#allocation1 + $0x8] sm:$0xff pattern:$0x73625140]
      %v973 = vld.sshfl [vmem:[#allocation1 + $0x10] sm:$0xff pattern:$0x73625140]
      %975 = vrot.lane.b32.xlu0 %v969, 91
      %v976 = vpop.permute.xlu0 %975
      %977 = vrot.lane.b32.xlu0 %v971, 91
      %v978 = vpop.permute.xlu0 %977
      %979 = vrot.lane.b32.xlu0 %v973, 91
      %v980 = vpop.permute.xlu0 %979
      %vm981 = vcmask 744448
      %v982 = vsel %vm981, %v976, %v978
      %v983 = vsel %vm981, %v978, %v980
      %v985 = vsel %vm209, %v965, 0
      %v988 = vsel %vm209, %v966, 0
      %v991 = vsel %vm216, %v982, 0
      %v994 = vsel %vm216, %v983, 0
      %v997 = vsel %vm216, %v980, 0
      %999 = vmatpush.bf16.msra.mxu0 0
      %1000 = vmatpush.bf16.msra.mxu0 0
      %1001 = vmatpush.bf16.msra.mxu0 0
      %1002 = vmatpush.bf16.msra.mxu0 0
      %1003 = vmatpush.bf16.msra.mxu0 0
      %1004 = vmatpush.bf16.msra.mxu0 0
      %1005 = vmatpush.bf16.msra.mxu0 0
      %1006 = vmatpush.bf16.msra.mxu0 %v991
      %1007 = vmatmul.bf16.gmra.mxu0 %v985
      %v1008 = vpop.f32.mrf.mxu0
      %v1009 = vadd.f32 0.0, %v1008
      %v1010 = vpop.f32.mrf.mxu0
      %v1011 = vadd.f32 0.0, %v1010
      %1012 = vmatmul.bf16.gmra.mxu0 %v988
      %v1013 = vpop.f32.mrf.mxu0
      %v1014 = vadd.f32 0.0, %v1013
      %v1015 = vpop.f32.mrf.mxu0
      %v1016 = vadd.f32 0.0, %v1015
      %1017 = vdwg.mxu0
      %1018 = vmatpush.bf16.msra.mxu0 0
      %1019 = vmatpush.bf16.msra.mxu0 0
      %1020 = vmatpush.bf16.msra.mxu0 0
      %1021 = vmatpush.bf16.msra.mxu0 0
      %1022 = vmatpush.bf16.msra.mxu0 0
      %1023 = vmatpush.bf16.msra.mxu0 0
      %1024 = vmatpush.bf16.msra.mxu0 0
      %1025 = vmatpush.bf16.msra.mxu0 %v994
      %1026 = vmatmul.bf16.gmra.mxu0 %v985
      %v1027 = vpop.f32.mrf.mxu0
      %v1028 = vadd.f32 0.0, %v1027
      %v1029 = vpop.f32.mrf.mxu0
      %v1030 = vadd.f32 0.0, %v1029
      %1031 = vmatmul.bf16.gmra.mxu0 %v988
      %v1032 = vpop.f32.mrf.mxu0
      %v1033 = vadd.f32 0.0, %v1032
      %v1034 = vpop.f32.mrf.mxu0
      %v1035 = vadd.f32 0.0, %v1034
      %1036 = vdwg.mxu0
      %1037 = vmatpush.bf16.msra.mxu0 0
      %1038 = vmatpush.bf16.msra.mxu0 0
      %1039 = vmatpush.bf16.msra.mxu0 0
      %1040 = vmatpush.bf16.msra.mxu0 0
      %1041 = vmatpush.bf16.msra.mxu0 0
      %1042 = vmatpush.bf16.msra.mxu0 0
      %1043 = vmatpush.bf16.msra.mxu0 0
      %1044 = vmatpush.bf16.msra.mxu0 %v997
      %1045 = vmatmul.bf16.gmra.mxu0 %v985
      %v1046 = vpop.f32.mrf.mxu0
      %v1047 = vadd.f32 0.0, %v1046
      %v1048 = vpop.f32.mrf.mxu0
      %v1049 = vadd.f32 0.0, %v1048
      %1050 = vmatmul.bf16.gmra.mxu0 %v988
      %v1051 = vpop.f32.mrf.mxu0
      %v1052 = vadd.f32 0.0, %v1051
      %v1053 = vpop.f32.mrf.mxu0
      %v1054 = vadd.f32 0.0, %v1053
      %1055 = vdwg.mxu0
      %v1056 = vadd.f32 %v939, %v1009
      %v1057 = vadd.f32 %v940, %v1028
      %v1058 = vadd.f32 %v941, %v1047
      %v1059 = vadd.f32 %v942, %v1011
      %v1060 = vadd.f32 %v943, %v1030
      %v1061 = vadd.f32 %v944, %v1049
      %v1062 = vadd.f32 %v945, %v1014
      %v1063 = vadd.f32 %v946, %v1033
      %v1064 = vadd.f32 %v947, %v1052
      %v1065 = vadd.f32 %v948, %v1016
      %v1066 = vadd.f32 %v949, %v1035
      %v1067 = vadd.f32 %v950, %v1054
      %v1068 = vld [vmem:[%s165] sm:$0x3f]
      %s1069 = scalar_lea.vmem %s1, 128
      %v1070 = vld [vmem:[%s1069] sm:$0xf]
      %v1071 = vld [vmem:[%s1069 + $0x4] sm:$0xf]
      %v1072 = vld [vmem:[%s1069 + $0x8] sm:$0xf]
      %v1073 = vld [vmem:[%s1069 + $0xc] sm:$0xf]
      %v1078 = vunpack.c.l.b16 %v1070
      %v1079 = vunpack.c.l.b16 %v1071
      %v1080 = vunpack.c.l.b16 %v1072
      %v1081 = vunpack.c.l.b16 %v1073
      %v1082 = vpack.c.b16 %v1079, %v1078
      %v1083 = vpack.c.b16 %v1081, %v1080
      %1085 = vst [vmem:[#allocation1] ss:$4 sm:$0xff] %v1068
      %v1086 = vld.sshfl [vmem:[#allocation1] sm:$0xff pattern:$0x73625140]
      %v1088 = vld.sshfl [vmem:[#allocation1 + $0x8] sm:$0xff pattern:$0x73625140]
      %v1090 = vld.sshfl [vmem:[#allocation1 + $0x10] sm:$0xff pattern:$0x73625140]
      %1092 = vrot.lane.b32.xlu0 %v1086, 90
      %v1093 = vpop.permute.xlu0 %1092
      %1094 = vrot.lane.b32.xlu0 %v1088, 90
      %v1095 = vpop.permute.xlu0 %1094
      %1096 = vrot.lane.b32.xlu0 %v1090, 90
      %v1097 = vpop.permute.xlu0 %1096
      %vm1098 = vcmask 736256
      %v1099 = vsel %vm1098, %v1093, %v1095
      %v1100 = vsel %vm1098, %v1095, %v1097
      %v1102 = vsel %vm209, %v1082, 0
      %v1105 = vsel %vm209, %v1083, 0
      %v1108 = vsel %vm216, %v1099, 0
      %v1111 = vsel %vm216, %v1100, 0
      %v1114 = vsel %vm216, %v1097, 0
      %1116 = vmatpush.bf16.msra.mxu0 0
      %1117 = vmatpush.bf16.msra.mxu0 0
      %1118 = vmatpush.bf16.msra.mxu0 0
      %1119 = vmatpush.bf16.msra.mxu0 0
      %1120 = vmatpush.bf16.msra.mxu0 0
      %1121 = vmatpush.bf16.msra.mxu0 0
      %1122 = vmatpush.bf16.msra.mxu0 0
      %1123 = vmatpush.bf16.msra.mxu0 %v1108
      %1124 = vmatmul.bf16.gmra.mxu0 %v1102
      %v1125 = vpop.f32.mrf.mxu0
      %v1126 = vadd.f32 0.0, %v1125
      %v1127 = vpop.f32.mrf.mxu0
      %v1128 = vadd.f32 0.0, %v1127
      %1129 = vmatmul.bf16.gmra.mxu0 %v1105
      %v1130 = vpop.f32.mrf.mxu0
      %v1131 = vadd.f32 0.0, %v1130
      %v1132 = vpop.f32.mrf.mxu0
      %v1133 = vadd.f32 0.0, %v1132
      %1134 = vdwg.mxu0
      %1135 = vmatpush.bf16.msra.mxu0 0
      %1136 = vmatpush.bf16.msra.mxu0 0
      %1137 = vmatpush.bf16.msra.mxu0 0
      %1138 = vmatpush.bf16.msra.mxu0 0
      %1139 = vmatpush.bf16.msra.mxu0 0
      %1140 = vmatpush.bf16.msra.mxu0 0
      %1141 = vmatpush.bf16.msra.mxu0 0
      %1142 = vmatpush.bf16.msra.mxu0 %v1111
      %1143 = vmatmul.bf16.gmra.mxu0 %v1102
      %v1144 = vpop.f32.mrf.mxu0
      %v1145 = vadd.f32 0.0, %v1144
      %v1146 = vpop.f32.mrf.mxu0
      %v1147 = vadd.f32 0.0, %v1146
      %1148 = vmatmul.bf16.gmra.mxu0 %v1105
      %v1149 = vpop.f32.mrf.mxu0
      %v1150 = vadd.f32 0.0, %v1149
      %v1151 = vpop.f32.mrf.mxu0
      %v1152 = vadd.f32 0.0, %v1151
      %1153 = vdwg.mxu0
      %1154 = vmatpush.bf16.msra.mxu0 0
      %1155 = vmatpush.bf16.msra.mxu0 0
      %1156 = vmatpush.bf16.msra.mxu0 0
      %1157 = vmatpush.bf16.msra.mxu0 0
      %1158 = vmatpush.bf16.msra.mxu0 0
      %1159 = vmatpush.bf16.msra.mxu0 0
      %1160 = vmatpush.bf16.msra.mxu0 0
      %1161 = vmatpush.bf16.msra.mxu0 %v1114
      %1162 = vmatmul.bf16.gmra.mxu0 %v1102
      %v1163 = vpop.f32.mrf.mxu0
      %v1164 = vadd.f32 0.0, %v1163
      %v1165 = vpop.f32.mrf.mxu0
      %v1166 = vadd.f32 0.0, %v1165
      %1167 = vmatmul.bf16.gmra.mxu0 %v1105
      %v1168 = vpop.f32.mrf.mxu0
      %v1169 = vadd.f32 0.0, %v1168
      %v1170 = vpop.f32.mrf.mxu0
      %v1171 = vadd.f32 0.0, %v1170
      %1172 = vdwg.mxu0
      %v1173 = vadd.f32 %v1056, %v1126
      %v1174 = vadd.f32 %v1057, %v1145
      %v1175 = vadd.f32 %v1058, %v1164
      %v1176 = vadd.f32 %v1059, %v1128
      %v1177 = vadd.f32 %v1060, %v1147
      %v1178 = vadd.f32 %v1061, %v1166
      %v1179 = vadd.f32 %v1062, %v1131
      %v1180 = vadd.f32 %v1063, %v1150
      %v1181 = vadd.f32 %v1064, %v1169
      %v1182 = vadd.f32 %v1065, %v1133
      %v1183 = vadd.f32 %v1066, %v1152
      %v1184 = vadd.f32 %v1067, %v1171
      %v1185 = vld [vmem:[%s2] sm:$0xff]
      %v1186 = vld [vmem:[%s2 + $0x8] sm:$0xff]
      %v1187 = vld [vmem:[%s2 + $0x10] sm:$0xff]
      %v1188 = vld [vmem:[%s2 + $0x18] sm:$0xff]
      %1190 = vset.pattern.permute.xlu0 0
      %1191 = vperm.xlu0 %1190, %v1185
      %v1192 = vpop.permute.xlu0 %1191
      %1195 = vset.pattern.permute.xlu0 0
      %1196 = vperm.xlu0 %1195, %v1186
      %v1197 = vpop.permute.xlu0 %1196
      %1200 = vset.pattern.permute.xlu0 0
      %1201 = vperm.xlu0 %1200, %v1187
      %v1202 = vpop.permute.xlu0 %1201
      %1205 = vset.pattern.permute.xlu0 0
      %1206 = vperm.xlu0 %1205, %v1188
      %v1207 = vpop.permute.xlu0 %1206
      %v1209 = vadd.f32 %v1173, %v1192
      %v1210 = vadd.f32 %v1174, %v1192
      %v1211 = vadd.f32 %v1175, %v1192
      %v1212 = vadd.f32 %v1176, %v1197
      %v1213 = vadd.f32 %v1177, %v1197
      %v1214 = vadd.f32 %v1178, %v1197
      %v1215 = vadd.f32 %v1179, %v1202
      %v1216 = vadd.f32 %v1180, %v1202
      %v1217 = vadd.f32 %v1181, %v1202
      %v1218 = vadd.f32 %v1182, %v1207
      %v1219 = vadd.f32 %v1183, %v1207
      %v1220 = vadd.f32 %v1184, %v1207
      %v1221 = vmax.f32 %v1209, 0.0
      %v1222 = vmax.f32 %v1210, 0.0
      %v1223 = vmax.f32 %v1211, 0.0
      %v1224 = vmax.f32 %v1212, 0.0
      %v1225 = vmax.f32 %v1213, 0.0
      %v1226 = vmax.f32 %v1214, 0.0
      %v1227 = vmax.f32 %v1215, 0.0
      %v1228 = vmax.f32 %v1216, 0.0
      %v1229 = vmax.f32 %v1217, 0.0
      %v1230 = vmax.f32 %v1218, 0.0
      %v1231 = vmax.f32 %v1219, 0.0
      %v1232 = vmax.f32 %v1220, 0.0
      %1233 = vst [vmem:[%s170] sm:$0xff] %v1221
      %1234 = vst [vmem:[%s170 + $0x8] sm:$0xff] %v1222
      %vm1235 = vcmask 261120
      %1236 = vst.msk [vmem:[%s170 + $0x10] sm:$0xff] %vm1235, %v1223
      %1237 = vst [vmem:[%s170 + $0x18] sm:$0xff] %v1224
      %1238 = vst [vmem:[%s170 + $0x20] sm:$0xff] %v1225
      %1239 = vst.msk [vmem:[%s170 + $0x28] sm:$0xff] %vm1235, %v1226
      %1240 = vst [vmem:[%s170 + $0x30] sm:$0xff] %v1227
      %1241 = vst [vmem:[%s170 + $0x38] sm:$0xff] %v1228
      %1242 = vst.msk [vmem:[%s170 + $0x40] sm:$0xff] %vm1235, %v1229
      %1243 = vst [vmem:[%s170 + $0x48] sm:$0xff] %v1230
      %1244 = vst [vmem:[%s170 + $0x50] sm:$0xff] %v1231
      %1245 = vst.msk [vmem:[%s170 + $0x58] sm:$0xff] %vm1235, %v1232
      %p1246 = scmp.lt.s32.totalorder %s14, 1
      %s1247 = scalar_select %p1246, %s14, 1
      %s1248 = smul.addr %s1247, 12
      %s1249 = smul.addr %s1248, 8
      %s1250 = scalar_lea.vmem %s3, %s1249
      // Predicated region
      $region33: #{basic_conv_forward.1} parent=31 // pred_check
        %p1251 = pneg %p100
      $region34: #{basic_conv_forward.1} parent=31 // pred_check_branch
        %1253 = sbr.rel (%p1251) target = $region36
      $region35: #{basic_conv_forward.1} parent=31 // pred_region
        _
      $region36: #{basic_conv_forward.1} parent=31 // pred_fallthru
        _
    $region32: #{basic_conv_forward.1} parent=5 // pred_fallthru
      _
    %p1254 = scmp.le.s32.totalorder 2, %s9
    // Predicated region
    $region37: #{basic_conv_forward.1} parent=5 // pred_check
      %p1255 = pneg %p1254
    $region38: #{basic_conv_forward.1} parent=5 // pred_check_branch
      %1257 = sbr.rel (%p1255) target = $region40
    $region39: #{basic_conv_forward.1} parent=5 // pred_region
      %s1258 = ssub.s32 %s9, 2
      // Predicated region
      $region41: #{basic_conv_forward.1} parent=39 // pred_check
        %p1259 = pneg %p106
      $region42: #{basic_conv_forward.1} parent=39 // pred_check_branch
        %1261 = sbr.rel (%p1259) target = $region44
      $region43: #{basic_conv_forward.1} parent=39 // pred_region
        %p1262 = scmp.lt.s32.totalorder %s15, 1
        %s1263 = scalar_select %p1262, %s15, 1
        %s1264 = smul.addr %s1263, 12
        %s1265 = smul.addr %s1264, 8
        %s1266 = scalar_lea.vmem %s3, %s1265
      $region44: #{basic_conv_forward.1} parent=39 // pred_fallthru
        _
    $region40: #{basic_conv_forward.1} parent=5 // pred_fallthru
      _
  $region6: #{basic_conv_forward.1} parent=0 // loop_footer
    %s13 = sadd.s32 1, %s9
  $region7: #{basic_conv_forward.1} parent=0 // loop_footer_branch
    %8 = sbr.rel target = $region3
  $region8: #{basic_conv_forward.1} parent=0 // loop_exit
    _

</llo_original>
